<compile_context>
chip_gen: v5e
topology: v5e:2x2
jax: 0.10.0
libtpu: 0.0.40
codegen_flags: <defaults>
</compile_context>

<pallas_src>
import jax
import jax.numpy as jnp
from jax import lax
from jax.experimental import pallas as pl
from jax.experimental.pallas import tpu as pltpu

LN_EPS = 1e-12

# ~2 MiB per streamed tile: measured tile sweeps already hit ~85% of the HBM
# roofline at 0.5-2 MiB; larger only inflates VMEM / spill pressure.
_TILE_BYTES_TARGET = 2 << 20


def _pick_tile_s(S, row_bytes, quantum):
    """Largest multiple of `quantum` dividing S, capped so each streamed tile
    stays ~<= 2 MiB and the seq grid axis keeps >= 4 steps when S allows
    (pipeline overlap + v7x two-TensorCore balance).  S must be a multiple of
    `quantum` (the wrapper pads it)."""
    cap = min(_TILE_BYTES_TARGET // max(1, row_bytes), max(quantum, S // 4))
    cap = max(quantum, (cap // quantum) * quantum)
    best = quantum
    t = quantum
    limit = min(S, cap)
    while t <= limit:
        if S % t == 0:
            best = t
        t += quantum
    return best


def _vmem_limit_bytes():
    # Generation-aware cap: never ask for more than half of physical VMEM
    # (v7x: 64 MiB total).  With <=2 MiB streaming tiles, 32 MiB is ample on
    # every generation and leaves the compiler plenty of scratch headroom.
    try:
        phys = pltpu.get_tpu_info().vmem_capacity_bytes
    except Exception:
        phys = 64 << 20
    return int(min(32 << 20, phys // 2))


# ---------------------------------------------------------------------------
# Kernel A: squeezed-batch layout.  Kernel sees dense 2-D (tile_s, D) tiles
# (seq rows on sublanes, d_model on lanes).  Used when D % 128 == 0 so output
# stores are lane-dense and each strided x/out DMA row is wide enough.
# ---------------------------------------------------------------------------
def _pos_enc_ln_kernel_2d(x_ref, pos_ref, tok_ref, gamma_ref, beta_ref, o_ref):
    # x_ref: (tile_s, D) one batch element's rows for this seq tile
    # pos_ref: (tile_s, D) position rows; tok/gamma/beta: (1, D)
    emb = (x_ref[...].astype(jnp.float32)
           + pos_ref[...].astype(jnp.float32)
           + tok_ref[...].astype(jnp.float32))          # (tile_s, D) f32

    # Single-pass LayerNorm stats: var = E[x^2] - mean^2.  Mild cancellation
    # risk is negligible at f32 for BERT-scale activations (<< 1e-5 tolerance)
    # and it avoids a second full-tile temporary (no `centered` spill).
    mean = jnp.mean(emb, axis=-1, keepdims=True)
    ex2 = jnp.mean(emb * emb, axis=-1, keepdims=True)
    inv = lax.rsqrt(ex2 - mean * mean + LN_EPS)

    gamma = gamma_ref[...].astype(jnp.float32)          # (1, D) broadcasts over rows
    beta = beta_ref[...].astype(jnp.float32)
    o_ref[...] = ((emb - mean) * inv * gamma + beta).astype(o_ref.dtype)


# ---------------------------------------------------------------------------
# Kernel B: small / non-128-multiple D.  Keeps the full contiguous (B, D) slab
# in the block (lane axis = D, sublane axis = B), one seq-tile per grid step.
# ---------------------------------------------------------------------------
def _pos_enc_ln_kernel_bd(x_ref, pos_ref, tok_ref, gamma_ref, beta_ref, o_ref):
    # x_ref: (tile_s, B, D); pos_ref: (tile_s, 1, D); tok/gamma/beta: (1, 1, D)
    emb = (x_ref[...].astype(jnp.float32)
           + pos_ref[...].astype(jnp.float32)           # broadcasts over B
           + tok_ref[...].astype(jnp.float32))          # broadcasts over seq & B

    mean = jnp.mean(emb, axis=-1, keepdims=True)
    ex2 = jnp.mean(emb * emb, axis=-1, keepdims=True)
    inv = lax.rsqrt(ex2 - mean * mean + LN_EPS)

    gamma = gamma_ref[...].astype(jnp.float32)          # (1, 1, D)
    beta = beta_ref[...].astype(jnp.float32)
    o_ref[...] = ((emb - mean) * inv * gamma + beta).astype(o_ref.dtype)


def positional_encodings(x, pos_table, tok_table, gamma, beta, *, tile_s=None):
    """Fused forward of PositionalEncodings (inference; dropout = identity).

    x:          (S, B, D)   activations, seq-first like the PyTorch module
    pos_table:  (max_len, D) position_embeddings.weight
    tok_table:  (2, D)       token_type_embeddings.weight (row 0 is used)
    gamma/beta: (D,)         LayerNorm affine parameters
    """
    S, B, D = x.shape
    max_len = pos_table.shape[0]
    assert S <= max_len, "sequence length exceeds the position table"

    x_item = jnp.dtype(x.dtype).itemsize
    pos_item = jnp.dtype(pos_table.dtype).itemsize
    quantum = 8 * max(1, 4 // min(x_item, pos_item))    # sublane rows per vreg

    # Pad irregular sequence lengths up to the sublane quantum.  Rows are
    # independent under LayerNorm, padded rows are sliced off below.
    S_pad = ((S + quantum - 1) // quantum) * quantum
    x_in = x if S_pad == S else jnp.pad(x, ((0, S_pad - S), (0, 0), (0, 0)))
    # Pass the full position table (no slice copy, no dtype cast): the grid
    # only ever DMAs rows [0, S_pad), which exist because S_pad is tiny past S.
    pos = pos_table if S_pad <= max_len else jnp.pad(
        pos_table, ((0, S_pad - max_len), (0, 0)))
    tok = tok_table[0:1]                                # (1, D), native dtype
    gamma2 = gamma.reshape(1, D)
    beta2 = beta.reshape(1, D)

    # Squeezed-batch layout only when output rows are lane-dense and each
    # strided per-row DMA is reasonably wide; otherwise keep (B, D) contiguous.
    use_2d = (D % 128 == 0) and (D * x_item >= 512)

    row_bytes = D * max(x_item, pos_item) if use_2d else B * D * x_item
    if tile_s is None:
        tile_s = _pick_tile_s(S_pad, row_bytes, quantum)
    elif tile_s % quantum != 0 or S_pad % tile_s != 0:
        raise ValueError(
            f"tile_s={tile_s} must be a multiple of {quantum} dividing {S_pad}")
    n_seq = S_pad // tile_s

    params = pltpu.CompilerParams(
        dimension_semantics=("parallel", "parallel") if use_2d else ("parallel",),
        vmem_limit_bytes=_vmem_limit_bytes(),
    )

    if use_2d:
        # grid = (seq tiles, batch); batch innermost so the pos tile's block
        # index is unchanged across it and its DMA is skipped.
        out = pl.pallas_call(
            _pos_enc_ln_kernel_2d,
            out_shape=jax.ShapeDtypeStruct((S_pad, B, D), x.dtype),
            grid_spec=pltpu.PrefetchScalarGridSpec(
                num_scalar_prefetch=0,
                grid=(n_seq, B),
                in_specs=[
                    pl.BlockSpec((tile_s, None, D), lambda i, b: (i, b, 0)),  # x
                    pl.BlockSpec((tile_s, D), lambda i, b: (i, 0)),           # pos
                    pl.BlockSpec((1, D), lambda i, b: (0, 0)),                # tok row 0
                    pl.BlockSpec((1, D), lambda i, b: (0, 0)),                # gamma
                    pl.BlockSpec((1, D), lambda i, b: (0, 0)),                # beta
                ],
                out_specs=pl.BlockSpec((tile_s, None, D), lambda i, b: (i, b, 0)),
            ),
            compiler_params=params,
        )(x_in, pos, tok, gamma2, beta2)
    else:
        out = pl.pallas_call(
            _pos_enc_ln_kernel_bd,
            out_shape=jax.ShapeDtypeStruct((S_pad, B, D), x.dtype),
            grid_spec=pltpu.PrefetchScalarGridSpec(
                num_scalar_prefetch=0,
                grid=(n_seq,),
                in_specs=[
                    pl.BlockSpec((tile_s, B, D), lambda i: (i, 0, 0)),        # x
                    pl.BlockSpec((tile_s, 1, D), lambda i: (i, 0, 0)),        # pos
                    pl.BlockSpec((1, 1, D), lambda i: (0, 0, 0)),             # tok row 0
                    pl.BlockSpec((1, 1, D), lambda i: (0, 0, 0)),             # gamma
                    pl.BlockSpec((1, 1, D), lambda i: (0, 0, 0)),             # beta
                ],
                out_specs=pl.BlockSpec((tile_s, B, D), lambda i: (i, 0, 0)),
            ),
            compiler_params=params,
        )(x_in, pos.reshape(-1, 1, D), tok.reshape(1, 1, D),
          gamma2.reshape(1, 1, D), beta2.reshape(1, 1, D))

    return out if S_pad == S else out[:S]


def reference(x, pos_table, tok_table, gamma, beta):
    S, B, D = x.shape
    pos = pos_table[jnp.arange(S)]                      # (S, D)
    tok = tok_table[0]                                  # (D,)
    emb = (x.astype(jnp.float32) + pos.astype(jnp.float32)[:, None, :]
           + tok.astype(jnp.float32)[None, None, :])
    mean = jnp.mean(emb, axis=-1, keepdims=True)
    var = jnp.mean((emb - mean) ** 2, axis=-1, keepdims=True)
    norm = (emb - mean) / jnp.sqrt(var + LN_EPS)
    return (norm * gamma.astype(jnp.float32)
            + beta.astype(jnp.float32)).astype(x.dtype)


def _run_case(key, seq_len, batch, d_model, max_len):
    kx, kpos, ktok, kg, kb = jax.random.split(key, 5)
    x = jax.random.normal(kx, (seq_len, batch, d_model), dtype=jnp.float32)
    # nn.Embedding default init ~ N(0, 1); LayerNorm weight=1 / bias=0
    # (perturbed slightly so the affine part is actually exercised).
    pos_table = jax.random.normal(kpos, (max_len, d_model), dtype=jnp.float32)
    tok_table = jax.random.normal(ktok, (2, d_model), dtype=jnp.float32)
    gamma = jnp.ones((d_model,), jnp.float32) + 0.01 * jax.random.normal(
        kg, (d_model,), dtype=jnp.float32)
    beta = 0.01 * jax.random.normal(kb, (d_model,), dtype=jnp.float32)

    out = jax.block_until_ready(
        positional_encodings(x, pos_table, tok_table, gamma, beta))
    ref = reference(x, pos_table, tok_table, gamma, beta)
    assert out.shape == (seq_len, batch, d_model)
    assert jnp.allclose(out, ref, atol=1e-5, rtol=1e-5), (
        float(jnp.max(jnp.abs(out - ref))))


if __name__ == "__main__":
    key = jax.random.PRNGKey(0)
    k1, k2 = jax.random.split(key)
    # Small-D path (contiguous (B, D) block layout).
    _run_case(k1, seq_len=16, batch=2, d_model=32, max_len=512)
    # Lane-dense D % 128 == 0 path (squeezed-batch layout) + irregular S (pad).
    _run_case(k2, seq_len=13, batch=2, d_model=128, max_len=512)
    print("KERNEL_OK")
</pallas_src>

<mosaic_0001>
module attributes {stable_mosaic.version = 11 : i64} {
  func.func @_pos_enc_ln_kernel_bd(%arg0: i32, %arg1: memref<8x2x32xf32, #tpu.memory_space<vmem>>, %arg2: memref<8x1x32xf32, #tpu.memory_space<vmem>>, %arg3: memref<1x1x32xf32, #tpu.memory_space<vmem>>, %arg4: memref<1x1x32xf32, #tpu.memory_space<vmem>>, %arg5: memref<1x1x32xf32, #tpu.memory_space<vmem>>, %arg6: memref<8x2x32xf32, #tpu.memory_space<vmem>>) attributes {dimension_semantics = [#tpu.dimension_semantics<parallel>], iteration_bounds = array<i64: 2>, scalar_prefetch = 0 : i64, scratch_operands = 0 : i64, tpu.core_type = #tpu.core_type<tc>, window_params = [{transform_indices = @transform_0, window_bounds = array<i64: 8, 2, 32>}, {transform_indices = @transform_1, window_bounds = array<i64: 8, 1, 32>}, {pipeline_mode = #tpu.pipeline_mode<synchronous>, transform_indices = @transform_2, window_bounds = array<i64: 1, 1, 32>}, {pipeline_mode = #tpu.pipeline_mode<synchronous>, transform_indices = @transform_3, window_bounds = array<i64: 1, 1, 32>}, {pipeline_mode = #tpu.pipeline_mode<synchronous>, transform_indices = @transform_4, window_bounds = array<i64: 1, 1, 32>}, {transform_indices = @transform_5, window_bounds = array<i64: 8, 2, 32>}]} {
    %c0 = arith.constant 0 : index
    %c0_0 = arith.constant 0 : index
    %c0_1 = arith.constant 0 : index
    %0 = vector.load %arg1[%c0, %c0_0, %c0_1] : memref<8x2x32xf32, #tpu.memory_space<vmem>>, vector<8x2x32xf32>
    %c0_2 = arith.constant 0 : index
    %c0_3 = arith.constant 0 : index
    %c0_4 = arith.constant 0 : index
    %1 = vector.load %arg2[%c0_2, %c0_3, %c0_4] : memref<8x1x32xf32, #tpu.memory_space<vmem>>, vector<8x1x32xf32>
    %2 = vector.broadcast %1 : vector<8x1x32xf32> to vector<8x2x32xf32>
    %3 = arith.addf %0, %2 : vector<8x2x32xf32>
    %c0_5 = arith.constant 0 : index
    %c0_6 = arith.constant 0 : index
    %c0_7 = arith.constant 0 : index
    %4 = vector.load %arg3[%c0_5, %c0_6, %c0_7] : memref<1x1x32xf32, #tpu.memory_space<vmem>>, vector<1x1x32xf32>
    %5 = vector.broadcast %4 : vector<1x1x32xf32> to vector<8x2x32xf32>
    %6 = arith.addf %3, %5 : vector<8x2x32xf32>
    %cst = arith.constant dense<0.000000e+00> : vector<8x2xf32>
    %7 = vector.multi_reduction <add>, %6, %cst [2] : vector<8x2x32xf32> to vector<8x2xf32>
    %8 = vector.shape_cast %7 : vector<8x2xf32> to vector<8x2x1xf32>
    %cst_8 = arith.constant 3.200000e+01 : f32
    %9 = vector.broadcast %cst_8 : f32 to vector<8x2x1xf32>
    %10 = arith.divf %8, %9 : vector<8x2x1xf32>
    %11 = arith.mulf %6, %6 : vector<8x2x32xf32>
    %cst_9 = arith.constant dense<0.000000e+00> : vector<8x2xf32>
    %12 = vector.multi_reduction <add>, %11, %cst_9 [2] : vector<8x2x32xf32> to vector<8x2xf32>
    %13 = vector.shape_cast %12 : vector<8x2xf32> to vector<8x2x1xf32>
    %cst_10 = arith.constant 3.200000e+01 : f32
    %14 = vector.broadcast %cst_10 : f32 to vector<8x2x1xf32>
    %15 = arith.divf %13, %14 : vector<8x2x1xf32>
    %16 = arith.mulf %10, %10 : vector<8x2x1xf32>
    %17 = arith.subf %15, %16 : vector<8x2x1xf32>
    %cst_11 = arith.constant 9.99999996E-13 : f32
    %18 = vector.broadcast %cst_11 : f32 to vector<8x2x1xf32>
    %19 = arith.addf %17, %18 : vector<8x2x1xf32>
    %20 = math.rsqrt %19 : vector<8x2x1xf32>
    %c0_12 = arith.constant 0 : index
    %c0_13 = arith.constant 0 : index
    %c0_14 = arith.constant 0 : index
    %21 = vector.load %arg4[%c0_12, %c0_13, %c0_14] : memref<1x1x32xf32, #tpu.memory_space<vmem>>, vector<1x1x32xf32>
    %c0_15 = arith.constant 0 : index
    %c0_16 = arith.constant 0 : index
    %c0_17 = arith.constant 0 : index
    %22 = vector.load %arg5[%c0_15, %c0_16, %c0_17] : memref<1x1x32xf32, #tpu.memory_space<vmem>>, vector<1x1x32xf32>
    %23 = vector.broadcast %10 : vector<8x2x1xf32> to vector<8x2x32xf32>
    %24 = arith.subf %6, %23 : vector<8x2x32xf32>
    %25 = vector.broadcast %20 : vector<8x2x1xf32> to vector<8x2x32xf32>
    %26 = arith.mulf %24, %25 : vector<8x2x32xf32>
    %27 = vector.broadcast %21 : vector<1x1x32xf32> to vector<8x2x32xf32>
    %28 = arith.mulf %26, %27 : vector<8x2x32xf32>
    %29 = vector.broadcast %22 : vector<1x1x32xf32> to vector<8x2x32xf32>
    %30 = arith.addf %28, %29 : vector<8x2x32xf32>
    %c0_18 = arith.constant 0 : index
    %c0_19 = arith.constant 0 : index
    %c0_20 = arith.constant 0 : index
    %31 = vector.load %arg6[%c0_18, %c0_19, %c0_20] : memref<8x2x32xf32, #tpu.memory_space<vmem>>, vector<8x2x32xf32>
    tpu.vector_store %arg6[%c0_18, %c0_19, %c0_20], %30 {strides = array<i32>} : memref<8x2x32xf32, #tpu.memory_space<vmem>>, vector<8x2x32xf32>,
    return
  }
  func.func @transform_0(%arg0: i32) -> (i32, i32, i32) {
    %c0_i32 = arith.constant 0 : i32
    %c0_i32_0 = arith.constant 0 : i32
    %c0_i32_1 = arith.constant 0 : i32
    return %arg0, %c0_i32, %c0_i32_0 : i32, i32, i32
  }
  func.func @transform_1(%arg0: i32) -> (i32, i32, i32) {
    %c0_i32 = arith.constant 0 : i32
    %c0_i32_0 = arith.constant 0 : i32
    %c0_i32_1 = arith.constant 0 : i32
    return %arg0, %c0_i32, %c0_i32_0 : i32, i32, i32
  }
  func.func @transform_2(%arg0: i32) -> (i32, i32, i32) {
    %c0_i32 = arith.constant 0 : i32
    %c0_i32_0 = arith.constant 0 : i32
    %c0_i32_1 = arith.constant 0 : i32
    %c0_i32_2 = arith.constant 0 : i32
    return %c0_i32, %c0_i32_0, %c0_i32_1 : i32, i32, i32
  }
  func.func @transform_3(%arg0: i32) -> (i32, i32, i32) {
    %c0_i32 = arith.constant 0 : i32
    %c0_i32_0 = arith.constant 0 : i32
    %c0_i32_1 = arith.constant 0 : i32
    %c0_i32_2 = arith.constant 0 : i32
    return %c0_i32, %c0_i32_0, %c0_i32_1 : i32, i32, i32
  }
  func.func @transform_4(%arg0: i32) -> (i32, i32, i32) {
    %c0_i32 = arith.constant 0 : i32
    %c0_i32_0 = arith.constant 0 : i32
    %c0_i32_1 = arith.constant 0 : i32
    %c0_i32_2 = arith.constant 0 : i32
    return %c0_i32, %c0_i32_0, %c0_i32_1 : i32, i32, i32
  }
  func.func @transform_5(%arg0: i32) -> (i32, i32, i32) {
    %c0_i32 = arith.constant 0 : i32
    %c0_i32_0 = arith.constant 0 : i32
    %c0_i32_1 = arith.constant 0 : i32
    return %arg0, %c0_i32, %c0_i32_0 : i32, i32, i32
  }
}

</mosaic_0001>

<llo_original>
// kernel: tpu_custom_call.1
$region0: #{tpu_custom_call.1}
  #allocation0 [shape = 'u32[]', space=smem, size = 0x4, offset = 0x4, fixed_abs, tag = 'smem constant byte address 0x4 - core index']
  #allocation1 [shape = 'u32[72,128]{1,0:T(1,128)}', space=vmem, size = 0x9000, scoped, tag = 'internal scratch']
  %s0 = inlined_call_operand.vmem [shape: f32[16,2,32], index: 0, kind: input, shape index: {}]
  %s1 = inlined_call_operand.vmem [shape: f32[512,1,32], index: 1, kind: input, shape index: {}]
  %s2 = inlined_call_operand.vmem [shape: f32[1,1,32], index: 2, kind: input, shape index: {}]
  %s3 = inlined_call_operand.vmem [shape: f32[1,1,32], index: 3, kind: input, shape index: {}]
  %s4 = inlined_call_operand.vmem [shape: f32[1,1,32], index: 4, kind: input, shape index: {}]
  %s5 = inlined_call_operand.hbm [shape: f32[16,2,32], index: 5, kind: output, shape index: {}]
  %s6 = sld [smem:[#allocation0]]
  $region53: #{tpu_custom_call.1} parent=0
    _
  %s8 = ssub.s32 1, %s6
  %s9 = scalar_select 0, %s8, %s6
  $region1: #{tpu_custom_call.1} parent=0
    #allocation2 [shape = 'u8[16384]{0}', space=vmem, size = 0x4000, scoped, tag = 'output window, operand 0']
    #allocation3 [shape = 's32[2]{0}', space=sflag, size = 0x8, scoped, tag = 'scoped memory for tpu_custom_call.1']
    %10 = vsyncpa [#allocation3], 0
    %s11 = scalar_lea.sflag [#allocation3], 1
    %12 = vsyncpa %s11, 0
    loop: start=0, step=1, limit=4
    $region2: #{tpu_custom_call.1} parent=1 // loop_pre_header
      _
    $region3: #{tpu_custom_call.1} parent=1 // loop_header
      %s14 = sphi 0, %s18
      %p15 = scmp.ge.s32.totalorder %s14, 4
      %s24 = sphi 0, %s26
      %s27 = sphi 0, %s24
      %s28 = sphi 0, %s27
      %s44 = sphi 0, %s28
      %s50 = sphi 0, %s52
      %s53 = sphi 0, %s50
      %s54 = sphi 0, %s53
      %s70 = sphi 0, %s54
      %s74 = sphi 0, %s74
      %s76 = sphi 0, %s74
      %s77 = sphi 0, %s76
      %s91 = sphi 0, %s77
      %s95 = sphi 0, %s95
      %s97 = sphi 0, %s95
      %s98 = sphi 0, %s97
      %s112 = sphi 0, %s98
      %s116 = sphi 0, %s116
      %s118 = sphi 0, %s116
      %s119 = sphi 0, %s118
      %s133 = sphi 0, %s119
      %s139 = sphi 0, %s141
      %s142 = sphi 0, %s139
      %s143 = sphi 0, %s142
      %s159 = sphi 0, %s143
    $region4: #{tpu_custom_call.1} parent=1 // loop_header_branch
      %17 = sbr.rel (%p15) target = $region8
    $region5: #{tpu_custom_call.1} parent=1 // loop_body
      %s19 = ssub.s32 %s14, 1
      %s20 = ssub.s32 %s14, 2
      %s21 = sadd.s32 %s14, 1
      %s22 = ssub.s32 %s14, %s21
      %p23 = scmp.eq.s32.totalorder %s22, 0
      %s25 = sadd.s32 %s24, 1
      %s26 = scalar_select %p23, %s24, %s25
      %p29 = pneg %p23
      %p30 = scmp.eq.s32.totalorder %s14, 1
      %p31 = por %p29, %p30
      %p32 = scmp.ne.s32.totalorder %s24, %s27
      %p33 = scmp.eq.s32.totalorder %s14, 0
      %p34 = por %p32, %p33
      %p35 = scmp.ne.s32.totalorder %s24, %s27
      %p36 = scmp.eq.s32.totalorder %s19, 1
      %p37 = por %p35, %p36
      %p38 = scmp.ne.s32.totalorder %s27, %s28
      %p39 = scmp.eq.s32.totalorder %s19, 0
      %p40 = por %p38, %p39
      %p41 = scmp.ne.s32.totalorder %s27, %s28
      %p42 = scmp.eq.s32.totalorder %s20, 1
      %p43 = por %p41, %p42
      %p45 = scmp.ne.s32.totalorder %s28, %s44
      %p46 = scmp.eq.s32.totalorder %s20, 0
      %p47 = por %p45, %p46
      %s48 = ssub.s32 %s14, %s21
      %p49 = scmp.eq.s32.totalorder %s48, 0
      %s51 = sadd.s32 %s50, 1
      %s52 = scalar_select %p49, %s50, %s51
      %p55 = pneg %p49
      %p56 = scmp.eq.s32.totalorder %s14, 1
      %p57 = por %p55, %p56
      %p58 = scmp.ne.s32.totalorder %s50, %s53
      %p59 = scmp.eq.s32.totalorder %s14, 0
      %p60 = por %p58, %p59
      %p61 = scmp.ne.s32.totalorder %s50, %s53
      %p62 = scmp.eq.s32.totalorder %s19, 1
      %p63 = por %p61, %p62
      %p64 = scmp.ne.s32.totalorder %s53, %s54
      %p65 = scmp.eq.s32.totalorder %s19, 0
      %p66 = por %p64, %p65
      %p67 = scmp.ne.s32.totalorder %s53, %s54
      %p68 = scmp.eq.s32.totalorder %s20, 1
      %p69 = por %p67, %p68
      %p71 = scmp.ne.s32.totalorder %s54, %s70
      %p72 = scmp.eq.s32.totalorder %s20, 0
      %p73 = por %p71, %p72
      %s75 = sadd.s32 %s74, 1
      %p78 = scmp.eq.s32.totalorder %s14, 1
      %p79 = scmp.ne.s32.totalorder %s74, %s76
      %p80 = scmp.eq.s32.totalorder %s14, 0
      %p81 = por %p79, %p80
      %p82 = scmp.ne.s32.totalorder %s74, %s76
      %p83 = scmp.eq.s32.totalorder %s19, 1
      %p84 = por %p82, %p83
      %p85 = scmp.ne.s32.totalorder %s76, %s77
      %p86 = scmp.eq.s32.totalorder %s19, 0
      %p87 = por %p85, %p86
      %p88 = scmp.ne.s32.totalorder %s76, %s77
      %p89 = scmp.eq.s32.totalorder %s20, 1
      %p90 = por %p88, %p89
      %p92 = scmp.ne.s32.totalorder %s77, %s91
      %p93 = scmp.eq.s32.totalorder %s20, 0
      %p94 = por %p92, %p93
      %s96 = sadd.s32 %s95, 1
      %p99 = scmp.eq.s32.totalorder %s14, 1
      %p100 = scmp.ne.s32.totalorder %s95, %s97
      %p101 = scmp.eq.s32.totalorder %s14, 0
      %p102 = por %p100, %p101
      %p103 = scmp.ne.s32.totalorder %s95, %s97
      %p104 = scmp.eq.s32.totalorder %s19, 1
      %p105 = por %p103, %p104
      %p106 = scmp.ne.s32.totalorder %s97, %s98
      %p107 = scmp.eq.s32.totalorder %s19, 0
      %p108 = por %p106, %p107
      %p109 = scmp.ne.s32.totalorder %s97, %s98
      %p110 = scmp.eq.s32.totalorder %s20, 1
      %p111 = por %p109, %p110
      %p113 = scmp.ne.s32.totalorder %s98, %s112
      %p114 = scmp.eq.s32.totalorder %s20, 0
      %p115 = por %p113, %p114
      %s117 = sadd.s32 %s116, 1
      %p120 = scmp.eq.s32.totalorder %s14, 1
      %p121 = scmp.ne.s32.totalorder %s116, %s118
      %p122 = scmp.eq.s32.totalorder %s14, 0
      %p123 = por %p121, %p122
      %p124 = scmp.ne.s32.totalorder %s116, %s118
      %p125 = scmp.eq.s32.totalorder %s19, 1
      %p126 = por %p124, %p125
      %p127 = scmp.ne.s32.totalorder %s118, %s119
      %p128 = scmp.eq.s32.totalorder %s19, 0
      %p129 = por %p127, %p128
      %p130 = scmp.ne.s32.totalorder %s118, %s119
      %p131 = scmp.eq.s32.totalorder %s20, 1
      %p132 = por %p130, %p131
      %p134 = scmp.ne.s32.totalorder %s119, %s133
      %p135 = scmp.eq.s32.totalorder %s20, 0
      %p136 = por %p134, %p135
      %s137 = ssub.s32 %s14, %s21
      %p138 = scmp.eq.s32.totalorder %s137, 0
      %s140 = sadd.s32 %s139, 1
      %s141 = scalar_select %p138, %s139, %s140
      %p144 = pneg %p138
      %p145 = scmp.eq.s32.totalorder %s14, 1
      %p146 = por %p144, %p145
      %p147 = scmp.ne.s32.totalorder %s139, %s142
      %p148 = scmp.eq.s32.totalorder %s14, 0
      %p149 = por %p147, %p148
      %p150 = scmp.ne.s32.totalorder %s139, %s142
      %p151 = scmp.eq.s32.totalorder %s19, 1
      %p152 = por %p150, %p151
      %p153 = scmp.ne.s32.totalorder %s142, %s143
      %p154 = scmp.eq.s32.totalorder %s19, 0
      %p155 = por %p153, %p154
      %p156 = scmp.ne.s32.totalorder %s142, %s143
      %p157 = scmp.eq.s32.totalorder %s20, 1
      %p158 = por %p156, %p157
      %p160 = scmp.ne.s32.totalorder %s143, %s159
      %p161 = scmp.eq.s32.totalorder %s20, 0
      %p162 = por %p160, %p161
      %p163 = scmp.le.s32.totalorder 1, %s14
      %p164 = scmp.lt.s32.totalorder %s14, 3
      %p165 = pnand %p163, %p164
      %p166 = pneg %p165
      // Predicated region
      $region9: #{tpu_custom_call.1} parent=5 // pred_check
        _
      $region10: #{tpu_custom_call.1} parent=5 // pred_check_branch
        %168 = sbr.rel (%p165) target = $region12
      $region11: #{tpu_custom_call.1} parent=5 // pred_region
        %s169 = ssub.s32 %s14, 1
        // Predicated region
        $region13: #{tpu_custom_call.1} parent=11 // pred_check
          %p170 = pneg %p87
        $region14: #{tpu_custom_call.1} parent=11 // pred_check_branch
          %172 = sbr.rel (%p170) target = $region16
        $region15: #{tpu_custom_call.1} parent=11 // pred_region
          _
        $region16: #{tpu_custom_call.1} parent=11 // pred_fallthru
          _
        // Predicated region
        $region17: #{tpu_custom_call.1} parent=11 // pred_check
          %p173 = pneg %p108
        $region18: #{tpu_custom_call.1} parent=11 // pred_check_branch
          %175 = sbr.rel (%p173) target = $region20
        $region19: #{tpu_custom_call.1} parent=11 // pred_region
          _
        $region20: #{tpu_custom_call.1} parent=11 // pred_fallthru
          _
        // Predicated region
        $region21: #{tpu_custom_call.1} parent=11 // pred_check
          %p176 = pneg %p129
        $region22: #{tpu_custom_call.1} parent=11 // pred_check_branch
          %178 = sbr.rel (%p176) target = $region24
        $region23: #{tpu_custom_call.1} parent=11 // pred_region
          _
        $region24: #{tpu_custom_call.1} parent=11 // pred_fallthru
          _
      $region12: #{tpu_custom_call.1} parent=5 // pred_fallthru
        _
      %p179 = scmp.lt.s32.totalorder %s14, 2
      // Predicated region
      $region25: #{tpu_custom_call.1} parent=5 // pred_check
        %p180 = pneg %p179
      $region26: #{tpu_custom_call.1} parent=5 // pred_check_branch
        %182 = sbr.rel (%p180) target = $region28
      $region27: #{tpu_custom_call.1} parent=5 // pred_region
        // Predicated region
        $region29: #{tpu_custom_call.1} parent=27 // pred_check
          %p183 = pneg %p34
        $region30: #{tpu_custom_call.1} parent=27 // pred_check_branch
          %185 = sbr.rel (%p183) target = $region32
        $region31: #{tpu_custom_call.1} parent=27 // pred_region
          %s186 = smul.u32 8, %s14
          %p187 = scmp.lt.s32.totalorder %s186, 15
          %s188 = scalar_select %p187, %s186, 15
          %s189 = smul.addr %s188, 2
          %s190 = scalar_lea.vmem %s0, %s189
          %s191 = smul.u32 8, %s14
        $region32: #{tpu_custom_call.1} parent=27 // pred_fallthru
          _
        // Predicated region
        $region33: #{tpu_custom_call.1} parent=27 // pred_check
          %p192 = pneg %p60
        $region34: #{tpu_custom_call.1} parent=27 // pred_check_branch
          %194 = sbr.rel (%p192) target = $region36
        $region35: #{tpu_custom_call.1} parent=27 // pred_region
          %s195 = smul.u32 8, %s14
          %p196 = scmp.lt.s32.totalorder %s195, 511
          %s197 = scalar_select %p196, %s195, 511
          %s198 = scalar_lea.vmem %s1, %s197
          %s199 = smul.u32 8, %s14
        $region36: #{tpu_custom_call.1} parent=27 // pred_fallthru
          _
      $region28: #{tpu_custom_call.1} parent=5 // pred_fallthru
        _
      %p200 = scmp.le.s32.totalorder 1, %s14
      %p201 = scmp.lt.s32.totalorder %s14, 3
      %p202 = pnand %p200, %p201
      %p203 = pneg %p202
      // Predicated region
      $region37: #{tpu_custom_call.1} parent=5 // pred_check
        _
      $region38: #{tpu_custom_call.1} parent=5 // pred_check_branch
        %205 = sbr.rel (%p202) target = $region40
      $region39: #{tpu_custom_call.1} parent=5 // pred_region
        %s206 = ssub.s32 %s14, 1
        %s207 = smul.u32 8, %s19
        %p208 = scmp.lt.s32.totalorder %s207, 15
        %s209 = scalar_select %p208, %s207, 15
        %s210 = smul.addr %s209, 2
        %s211 = scalar_lea.vmem %s0, %s210
        %p212 = pneg %p40
        %p213 = pneg %p37
        %s214 = smul.u32 8, %s19
        %p215 = scmp.lt.s32.totalorder %s214, 511
        %s216 = scalar_select %p215, %s214, 511
        %s217 = scalar_lea.vmem %s1, %s216
        %p218 = pneg %p66
        %p219 = pneg %p63
        %p220 = pneg %p87
        %p221 = pneg %p84
        %p222 = pneg %p108
        %p223 = pneg %p105
        %p224 = pneg %p129
        %p225 = pneg %p126
        %p226 = pneg %p155
        %p227 = pneg %p152
        %s228 = sand.u32 %s142, 1
        %s229 = scalar_lea.sflag [#allocation3], %s228
        %s230 = sand.u32 %s142, 1
        %s231 = smul.addr %s230, 16
        %s232 = scalar_lea.vmem [#allocation2], %s231
        %s233 = smul.u32 8, %s19
        %p234 = scmp.lt.s32.totalorder %s233, 15
        %s235 = scalar_select %p234, %s233, 15
        %s236 = smul.addr %s235, 2
        %s237 = scalar_lea.vmem %s0, %s236
        %s238 = smul.u32 8, %s19
        %s239 = smul.u32 8, %s19
        %p240 = scmp.lt.s32.totalorder %s239, 511
        %s241 = scalar_select %p240, %s239, 511
        %s242 = scalar_lea.vmem %s1, %s241
        %s243 = smul.u32 8, %s19
        %s244 = smul.u32 8, %s19
        %v245 = vld [vmem:[%s237] sm:$0x3]
        %v246 = vld [vmem:[%s237 + $0x2] sm:$0x3]
        %v247 = vld [vmem:[%s237 + $0x4] sm:$0x3]
        %v248 = vld [vmem:[%s237 + $0x6] sm:$0x3]
        %v249 = vld [vmem:[%s237 + $0x8] sm:$0x3]
        %v250 = vld [vmem:[%s237 + $0xa] sm:$0x3]
        %v251 = vld [vmem:[%s237 + $0xc] sm:$0x3]
        %v252 = vld [vmem:[%s237 + $0xe] sm:$0x3]
        %v253 = vld [vmem:[%s242] sm:$0x1]
        %v254 = vld [vmem:[%s242 + $0x1] sm:$0x1]
        %v255 = vld [vmem:[%s242 + $0x2] sm:$0x1]
        %v256 = vld [vmem:[%s242 + $0x3] sm:$0x1]
        %v257 = vld [vmem:[%s242 + $0x4] sm:$0x1]
        %v258 = vld [vmem:[%s242 + $0x5] sm:$0x1]
        %v259 = vld [vmem:[%s242 + $0x6] sm:$0x1]
        %v260 = vld [vmem:[%s242 + $0x7] sm:$0x1]
        %v269 = vperm.slane %v253, 0
        %v270 = vperm.slane %v254, 0
        %v271 = vperm.slane %v255, 0
        %v272 = vperm.slane %v256, 0
        %v273 = vperm.slane %v257, 0
        %v274 = vperm.slane %v258, 0
        %v275 = vperm.slane %v259, 0
        %v276 = vperm.slane %v260, 0
        %v285 = vadd.f32 %v245, %v269
        %v286 = vadd.f32 %v246, %v270
        %v287 = vadd.f32 %v247, %v271
        %v288 = vadd.f32 %v248, %v272
        %v289 = vadd.f32 %v249, %v273
        %v290 = vadd.f32 %v250, %v274
        %v291 = vadd.f32 %v251, %v275
        %v292 = vadd.f32 %v252, %v276
        %v293 = vld [vmem:[%s2] sm:$0x1]
        %v295 = vperm.slane %v293, 0
        %v297 = vadd.f32 %v285, %v295
        %v298 = vadd.f32 %v286, %v295
        %v299 = vadd.f32 %v287, %v295
        %v300 = vadd.f32 %v288, %v295
        %v301 = vadd.f32 %v289, %v295
        %v302 = vadd.f32 %v290, %v295
        %v303 = vadd.f32 %v291, %v295
        %v304 = vadd.f32 %v292, %v295
        %vm305 = vcmask 254976
        %v306 = vsel %vm305, %v297, 0.0
        %307 = vadd.xlane.f32.xlu0 %v306
        %v308 = vpop.xlane.xlu0 %307
        %v309 = vsel %vm305, %v298, 0.0
        %310 = vadd.xlane.f32.xlu0 %v309
        %v311 = vpop.xlane.xlu0 %310
        %v312 = vsel %vm305, %v299, 0.0
        %313 = vadd.xlane.f32.xlu0 %v312
        %v314 = vpop.xlane.xlu0 %313
        %v315 = vsel %vm305, %v300, 0.0
        %316 = vadd.xlane.f32.xlu0 %v315
        %v317 = vpop.xlane.xlu0 %316
        %v318 = vsel %vm305, %v301, 0.0
        %319 = vadd.xlane.f32.xlu0 %v318
        %v320 = vpop.xlane.xlu0 %319
        %v321 = vsel %vm305, %v302, 0.0
        %322 = vadd.xlane.f32.xlu0 %v321
        %v323 = vpop.xlane.xlu0 %322
        %v324 = vsel %vm305, %v303, 0.0
        %325 = vadd.xlane.f32.xlu0 %v324
        %v326 = vpop.xlane.xlu0 %325
        %v327 = vsel %vm305, %v304, 0.0
        %328 = vadd.xlane.f32.xlu0 %v327
        %v329 = vpop.xlane.xlu0 %328
        %v330 = vrcp.pop 32.0
        %v331 = vmul.f32 32.0, %v330
        %v332 = vsub.f32 1.0, %v331
        %v333 = vmul.f32 %v330, %v332
        %v334 = vadd.f32 %v330, %v333
        %vm335 = vweird.f32 %v330
        %v336 = vsel %vm335, %v330, %v334
        %v337 = vmul.f32 %v308, %v336
        %v338 = vmul.f32 %v311, %v336
        %v339 = vmul.f32 %v314, %v336
        %v340 = vmul.f32 %v317, %v336
        %v341 = vmul.f32 %v320, %v336
        %v342 = vmul.f32 %v323, %v336
        %v343 = vmul.f32 %v326, %v336
        %v344 = vmul.f32 %v329, %v336
        %v345 = vmul.f32 %v297, %v297
        %v346 = vmul.f32 %v298, %v298
        %v347 = vmul.f32 %v299, %v299
        %v348 = vmul.f32 %v300, %v300
        %v349 = vmul.f32 %v301, %v301
        %v350 = vmul.f32 %v302, %v302
        %v351 = vmul.f32 %v303, %v303
        %v352 = vmul.f32 %v304, %v304
        %v353 = vsel %vm305, %v345, 0.0
        %354 = vadd.xlane.f32.xlu0 %v353
        %v355 = vpop.xlane.xlu0 %354
        %v356 = vsel %vm305, %v346, 0.0
        %357 = vadd.xlane.f32.xlu0 %v356
        %v358 = vpop.xlane.xlu0 %357
        %v359 = vsel %vm305, %v347, 0.0
        %360 = vadd.xlane.f32.xlu0 %v359
        %v361 = vpop.xlane.xlu0 %360
        %v362 = vsel %vm305, %v348, 0.0
        %363 = vadd.xlane.f32.xlu0 %v362
        %v364 = vpop.xlane.xlu0 %363
        %v365 = vsel %vm305, %v349, 0.0
        %366 = vadd.xlane.f32.xlu0 %v365
        %v367 = vpop.xlane.xlu0 %366
        %v368 = vsel %vm305, %v350, 0.0
        %369 = vadd.xlane.f32.xlu0 %v368
        %v370 = vpop.xlane.xlu0 %369
        %v371 = vsel %vm305, %v351, 0.0
        %372 = vadd.xlane.f32.xlu0 %v371
        %v373 = vpop.xlane.xlu0 %372
        %v374 = vsel %vm305, %v352, 0.0
        %375 = vadd.xlane.f32.xlu0 %v374
        %v376 = vpop.xlane.xlu0 %375
        %v377 = vmul.f32 %v355, %v336
        %v378 = vmul.f32 %v358, %v336
        %v379 = vmul.f32 %v361, %v336
        %v380 = vmul.f32 %v364, %v336
        %v381 = vmul.f32 %v367, %v336
        %v382 = vmul.f32 %v370, %v336
        %v383 = vmul.f32 %v373, %v336
        %v384 = vmul.f32 %v376, %v336
        %v385 = vmul.f32 %v337, %v337
        %v386 = vmul.f32 %v338, %v338
        %v387 = vmul.f32 %v339, %v339
        %v388 = vmul.f32 %v340, %v340
        %v389 = vmul.f32 %v341, %v341
        %v390 = vmul.f32 %v342, %v342
        %v391 = vmul.f32 %v343, %v343
        %v392 = vmul.f32 %v344, %v344
        %v393 = vsub.f32 %v377, %v385
        %v394 = vsub.f32 %v378, %v386
        %v395 = vsub.f32 %v379, %v387
        %v396 = vsub.f32 %v380, %v388
        %v397 = vsub.f32 %v381, %v389
        %v398 = vsub.f32 %v382, %v390
        %v399 = vsub.f32 %v383, %v391
        %v400 = vsub.f32 %v384, %v392
        %v401 = vadd.f32 %v393, 1e-12
        %v402 = vadd.f32 %v394, 1e-12
        %v403 = vadd.f32 %v395, 1e-12
        %v404 = vadd.f32 %v396, 1e-12
        %v405 = vadd.f32 %v397, 1e-12
        %v406 = vadd.f32 %v398, 1e-12
        %v407 = vadd.f32 %v399, 1e-12
        %v408 = vadd.f32 %v400, 1e-12
        %v409 = vrsqrt.pop %v401
        %v410 = vmul.f32 %v409, %v401
        %v411 = vmul.f32 %v410, %v409
        %v412 = vmul.f32 0.5, %v411
        %v413 = vsub.f32 1.5, %v412
        %v414 = vmul.f32 %v409, %v413
        %vm415 = vweird.f32 %v401
        %vm416 = vweird.f32 %v409
        %vm417 = vmor %vm415, %vm416
        %v418 = vsel %vm417, %v409, %v414
        %v419 = vrsqrt.pop %v402
        %v420 = vmul.f32 %v419, %v402
        %v421 = vmul.f32 %v420, %v419
        %v422 = vmul.f32 0.5, %v421
        %v423 = vsub.f32 1.5, %v422
        %v424 = vmul.f32 %v419, %v423
        %vm425 = vweird.f32 %v402
        %vm426 = vweird.f32 %v419
        %vm427 = vmor %vm425, %vm426
        %v428 = vsel %vm427, %v419, %v424
        %v429 = vrsqrt.pop %v403
        %v430 = vmul.f32 %v429, %v403
        %v431 = vmul.f32 %v430, %v429
        %v432 = vmul.f32 0.5, %v431
        %v433 = vsub.f32 1.5, %v432
        %v434 = vmul.f32 %v429, %v433
        %vm435 = vweird.f32 %v403
        %vm436 = vweird.f32 %v429
        %vm437 = vmor %vm435, %vm436
        %v438 = vsel %vm437, %v429, %v434
        %v439 = vrsqrt.pop %v404
        %v440 = vmul.f32 %v439, %v404
        %v441 = vmul.f32 %v440, %v439
        %v442 = vmul.f32 0.5, %v441
        %v443 = vsub.f32 1.5, %v442
        %v444 = vmul.f32 %v439, %v443
        %vm445 = vweird.f32 %v404
        %vm446 = vweird.f32 %v439
        %vm447 = vmor %vm445, %vm446
        %v448 = vsel %vm447, %v439, %v444
        %v449 = vrsqrt.pop %v405
        %v450 = vmul.f32 %v449, %v405
        %v451 = vmul.f32 %v450, %v449
        %v452 = vmul.f32 0.5, %v451
        %v453 = vsub.f32 1.5, %v452
        %v454 = vmul.f32 %v449, %v453
        %vm455 = vweird.f32 %v405
        %vm456 = vweird.f32 %v449
        %vm457 = vmor %vm455, %vm456
        %v458 = vsel %vm457, %v449, %v454
        %v459 = vrsqrt.pop %v406
        %v460 = vmul.f32 %v459, %v406
        %v461 = vmul.f32 %v460, %v459
        %v462 = vmul.f32 0.5, %v461
        %v463 = vsub.f32 1.5, %v462
        %v464 = vmul.f32 %v459, %v463
        %vm465 = vweird.f32 %v406
        %vm466 = vweird.f32 %v459
        %vm467 = vmor %vm465, %vm466
        %v468 = vsel %vm467, %v459, %v464
        %v469 = vrsqrt.pop %v407
        %v470 = vmul.f32 %v469, %v407
        %v471 = vmul.f32 %v470, %v469
        %v472 = vmul.f32 0.5, %v471
        %v473 = vsub.f32 1.5, %v472
        %v474 = vmul.f32 %v469, %v473
        %vm475 = vweird.f32 %v407
        %vm476 = vweird.f32 %v469
        %vm477 = vmor %vm475, %vm476
        %v478 = vsel %vm477, %v469, %v474
        %v479 = vrsqrt.pop %v408
        %v480 = vmul.f32 %v479, %v408
        %v481 = vmul.f32 %v480, %v479
        %v482 = vmul.f32 0.5, %v481
        %v483 = vsub.f32 1.5, %v482
        %v484 = vmul.f32 %v479, %v483
        %vm485 = vweird.f32 %v408
        %vm486 = vweird.f32 %v479
        %vm487 = vmor %vm485, %vm486
        %v488 = vsel %vm487, %v479, %v484
        %v489 = vld [vmem:[%s3] sm:$0x1]
        %v490 = vld [vmem:[%s4] sm:$0x1]
        %v491 = vsub.f32 %v297, %v337
        %v492 = vsub.f32 %v298, %v338
        %v493 = vsub.f32 %v299, %v339
        %v494 = vsub.f32 %v300, %v340
        %v495 = vsub.f32 %v301, %v341
        %v496 = vsub.f32 %v302, %v342
        %v497 = vsub.f32 %v303, %v343
        %v498 = vsub.f32 %v304, %v344
        %v499 = vmul.f32 %v491, %v418
        %v500 = vmul.f32 %v492, %v428
        %v501 = vmul.f32 %v493, %v438
        %v502 = vmul.f32 %v494, %v448
        %v503 = vmul.f32 %v495, %v458
        %v504 = vmul.f32 %v496, %v468
        %v505 = vmul.f32 %v497, %v478
        %v506 = vmul.f32 %v498, %v488
        %v508 = vperm.slane %v489, 0
        %v510 = vmul.f32 %v499, %v508
        %v511 = vmul.f32 %v500, %v508
        %v512 = vmul.f32 %v501, %v508
        %v513 = vmul.f32 %v502, %v508
        %v514 = vmul.f32 %v503, %v508
        %v515 = vmul.f32 %v504, %v508
        %v516 = vmul.f32 %v505, %v508
        %v517 = vmul.f32 %v506, %v508
        %v519 = vperm.slane %v490, 0
        %v521 = vadd.f32 %v510, %v519
        %v522 = vadd.f32 %v511, %v519
        %v523 = vadd.f32 %v512, %v519
        %v524 = vadd.f32 %v513, %v519
        %v525 = vadd.f32 %v514, %v519
        %v526 = vadd.f32 %v515, %v519
        %v527 = vadd.f32 %v516, %v519
        %v528 = vadd.f32 %v517, %v519
        %529 = vst.msk [vmem:[%s232] sm:$0x3] %vm305, %v521
        %530 = vst.msk [vmem:[%s232 + $0x2] sm:$0x3] %vm305, %v522
        %531 = vst.msk [vmem:[%s232 + $0x4] sm:$0x3] %vm305, %v523
        %532 = vst.msk [vmem:[%s232 + $0x6] sm:$0x3] %vm305, %v524
        %533 = vst.msk [vmem:[%s232 + $0x8] sm:$0x3] %vm305, %v525
        %534 = vst.msk [vmem:[%s232 + $0xa] sm:$0x3] %vm305, %v526
        %535 = vst.msk [vmem:[%s232 + $0xc] sm:$0x3] %vm305, %v527
        %536 = vst.msk [vmem:[%s232 + $0xe] sm:$0x3] %vm305, %v528
        %s537 = sand.u32 %s142, 1
        %s538 = scalar_lea.sflag [#allocation3], %s537
        %s539 = sand.u32 %s142, 1
        %s540 = smul.addr %s539, 16
        %s541 = scalar_lea.vmem [#allocation2], %s540
        // Predicated region
        $region41: #{tpu_custom_call.1} parent=39 // pred_check
          %p542 = pneg %p152
        $region42: #{tpu_custom_call.1} parent=39 // pred_check_branch
          %544 = sbr.rel (%p542) target = $region44
        $region43: #{tpu_custom_call.1} parent=39 // pred_region
          %s545 = smul.u32 8, %s19
          %547 = vsyncadd %s538, 0
          %s548 = smul.addr %s545, 2
          %s549 = scalar_lea.hbm %s5, %s548
          %s550 = sshll.u32 %s541, 4
          %s551 = int_to_ptr.vmem [resolvable:$true] %s550
          %s552 = sshll.u32 %s549, 4
          %s553 = int_to_ptr.hbm [resolvable:$true] %s552
          %558 = dma.vmem_to_hbm [thread:$0]  %s551, 256, %s553, %s538, 32, 32, 2
        $region44: #{tpu_custom_call.1} parent=39 // pred_fallthru
          _
      $region40: #{tpu_custom_call.1} parent=5 // pred_fallthru
        _
      %p559 = scmp.le.s32.totalorder 2, %s14
      // Predicated region
      $region45: #{tpu_custom_call.1} parent=5 // pred_check
        %p560 = pneg %p559
      $region46: #{tpu_custom_call.1} parent=5 // pred_check_branch
        %562 = sbr.rel (%p560) target = $region48
      $region47: #{tpu_custom_call.1} parent=5 // pred_region
        %s563 = ssub.s32 %s14, 2
        // Predicated region
        $region49: #{tpu_custom_call.1} parent=47 // pred_check
          %p564 = pneg %p158
        $region50: #{tpu_custom_call.1} parent=47 // pred_check_branch
          %566 = sbr.rel (%p564) target = $region52
        $region51: #{tpu_custom_call.1} parent=47 // pred_region
          %s567 = sand.u32 %s143, 1
          %s568 = scalar_lea.sflag [#allocation3], %s567
          %s569 = sand.u32 %s143, 1
          %s570 = smul.addr %s569, 16
          %s571 = scalar_lea.vmem [#allocation2], %s570
          %573 = dma.done %s568, 256
        $region52: #{tpu_custom_call.1} parent=47 // pred_fallthru
          _
      $region48: #{tpu_custom_call.1} parent=5 // pred_fallthru
        _
    $region6: #{tpu_custom_call.1} parent=1 // loop_footer
      %s18 = sadd.s32 1, %s14
    $region7: #{tpu_custom_call.1} parent=1 // loop_footer_branch
      %13 = sbr.rel target = $region3
    $region8: #{tpu_custom_call.1} parent=1 // loop_exit
      _
    %574 = vsyncpa [#allocation3], 1
    %s575 = scalar_lea.sflag [#allocation3], 1
    %576 = vsyncpa %s575, 1

</llo_original>
